<compile_context>
chip_gen: v7x
topology: tpu7x:2x2x1
jax: 0.10.0
libtpu: 0.0.40
codegen_flags: <defaults>
</compile_context>

<pallas_src>
import jax
import jax.numpy as jnp
from jax.experimental import pallas as pl
from jax.experimental.pallas import tpu as pltpu


def _ngram_linear_kernel(ng_ref, w_ref, b_ref, out_ref):
    # ng_ref : (tM, Kp)   bf16 ngram features, Kp = padded (N-1)*E
    # w_ref  : (Kp, tV)   bf16 linear weight tile (pre-transposed)
    # b_ref  : (1, tV)    f32 bias tile
    # out_ref: (tM, tV)   bf16 logits tile
    acc = jnp.dot(ng_ref[...], w_ref[...], preferred_element_type=jnp.float32)
    out_ref[...] = (acc + b_ref[...]).astype(out_ref.dtype)


def _round_up(x, m):
    return ((x + m - 1) // m) * m


def _pad_k(K):
    # Pad K to a lane-dense multiple of 128 only if the extra weight/ngram
    # traffic is small (<= 12.5%); otherwise just keep bf16 sublane alignment.
    Kp = _round_up(K, 128)
    if (Kp - K) * 8 > K:
        Kp = _round_up(K, 16)
    return Kp


def make_ngram_lm_forward(emb_table, w, b, *, N=4, t_tile=1024, v_tile=512,
                          compute_dtype=jnp.bfloat16, out_dtype=jnp.bfloat16):
    """Build a jitted NgramLM forward with all param prep hoisted out.

    emb_table : (V, E)           embedding weight
    w         : (V, (N-1)*E)     linear weight (PyTorch nn.Linear layout)
    b         : (V,)             linear bias
    returns   : forward(x: (B, T) int32) -> (B, T, V) logits in `out_dtype`
    """
    assert t_tile % 16 == 0, "t_tile must be a multiple of 16 (bf16 sublanes)"
    assert v_tile % 128 == 0, "v_tile must be a multiple of 128 (lane width)"

    num_preceding = N - 1
    V, E = emb_table.shape
    K = num_preceding * E
    assert w.shape == (V, K) and b.shape == (V,)

    Kp = _pad_k(K)
    tV = min(v_tile, _round_up(V, 128))      # lane-dense V tile
    Vp = _round_up(V, tV)

    # ---- one-time param prep (NOT in the per-call hot path) -------------
    emb_c = emb_table.astype(compute_dtype)                       # (V, E) bf16
    w_t = jnp.pad(jnp.transpose(w).astype(compute_dtype),
                  ((0, Kp - K), (0, Vp - V)))                      # (Kp, Vp)
    b_p = jnp.pad(b.astype(jnp.float32), (0, Vp - V)).reshape(1, Vp)

    out_isz = jnp.dtype(out_dtype).itemsize

    def _vmem_bytes(tM):
        return (2 * (tM * Kp + Kp * tV) * 2      # bf16 inputs, double-buffered
                + 2 * tM * tV * out_isz          # output, double-buffered
                + 2 * tV * 4)                    # f32 bias

    @jax.jit
    def forward(x):
        B, T = x.shape

        # --- glue (plain JAX, bf16): gather + zero-pad + window concat ---
        # TODO(synk): the embedding gather / ngram window build stays outside
        # the kernel; fusing it in would need scalar-prefetched token ids plus
        # a manual DMA gather from the embedding table.
        embs = emb_c[x]                                            # (B, T, E) bf16
        pad = jnp.zeros((B, num_preceding - 1, E), compute_dtype)
        embs_p = jnp.concatenate([pad, embs], axis=1)              # (B, T+N-2, E)
        ngram = jnp.concatenate(
            [embs_p[:, i:T + i, :] for i in range(num_preceding)],
            axis=-1)                                               # (B, T, K)

        # --- flatten (B, T) -> M and pad to tile multiples ----------------
        M = B * T
        tM = min(t_tile, _round_up(M, 16))
        while _vmem_bytes(tM) > 44 * 1024 * 1024 and tM > 256:
            tM //= 2                              # keep v7x (64 MiB VMEM) safe
        Mp = _round_up(M, tM)

        ngram_p = jnp.pad(ngram.reshape(M, K), ((0, Mp - M), (0, Kp - K)))

        # Grid: V innermost -> ngram tile block index unchanged across the
        # inner axis (reused in VMEM); the (Kp, tV) weight tile streams, with
        # arithmetic intensity tM FLOPs per weight byte.
        grid = (Mp // tM, Vp // tV)

        cost = pl.CostEstimate(
            flops=2 * Mp * Vp * Kp,
            transcendentals=0,
            bytes_accessed=(Mp * Kp * 2                       # ngram (read once)
                            + (Mp // tM) * Kp * Vp * 2        # streamed weight
                            + Vp * 4                          # bias
                            + Mp * Vp * out_isz))             # logits writeback

        vmem_limit = int(min(max(2 * _vmem_bytes(tM), 32 * 1024 * 1024),
                             48 * 1024 * 1024))

        out = pl.pallas_call(
            _ngram_linear_kernel,
            out_shape=jax.ShapeDtypeStruct((Mp, Vp), out_dtype),
            grid=grid,
            in_specs=[
                pl.BlockSpec((tM, Kp), lambda mi, vi: (mi, 0)),
                pl.BlockSpec((Kp, tV), lambda mi, vi: (0, vi)),
                pl.BlockSpec((1, tV), lambda mi, vi: (0, vi)),
            ],
            out_specs=pl.BlockSpec((tM, tV), lambda mi, vi: (mi, vi)),
            compiler_params=pltpu.CompilerParams(
                dimension_semantics=("parallel", "parallel"),
                vmem_limit_bytes=vmem_limit,
            ),
            cost_estimate=cost,
        )(ngram_p, w_t, b_p)

        # TODO(synk): this slice should fuse into the consumer (e.g. the
        # cross-entropy loss); if it does not, prefer consuming the padded
        # (Mp, Vp) buffer directly to avoid an extra full-logits copy.
        return out[:M].reshape(B, T, Vp)[:, :, :V]

    return forward


if __name__ == "__main__":
    vocab_sz, emb_sz, N = 32, 16, 4
    B, T = 2, 8

    key = jax.random.PRNGKey(0)
    k_emb, k_w, k_b, k_x = jax.random.split(key, 4)

    # Deterministic synthetic parameters (same shapes as the nn.Module).
    emb_table = jax.random.normal(k_emb, (vocab_sz, emb_sz), jnp.float32)
    w = jax.random.normal(k_w, (vocab_sz, (N - 1) * emb_sz), jnp.float32) * 0.05
    b = jax.random.normal(k_b, (vocab_sz,), jnp.float32) * 0.05
    x = jax.random.randint(k_x, (B, T), 0, vocab_sz, dtype=jnp.int32)

    forward = make_ngram_lm_forward(emb_table, w, b, N=N)
    out = forward(x)
    out = jax.block_until_ready(out)

    # Pure-JAX f32 reference (mirrors the PyTorch forward exactly).
    embs = emb_table[x]
    embs_p = jnp.concatenate(
        [jnp.zeros((B, N - 2, emb_sz), jnp.float32), embs], axis=1)
    ngram = jnp.concatenate(
        [embs_p[:, i:T + i, :] for i in range(N - 1)], axis=-1)
    ref = ngram @ w.T + b

    assert out.shape == (B, T, vocab_sz)
    # bf16 operands/output (f32 accumulation) vs f32 reference -> relaxed tol.
    err = float(jnp.max(jnp.abs(out.astype(jnp.float32) - ref)))
    assert jnp.allclose(out.astype(jnp.float32), ref, atol=5e-2, rtol=5e-2), err
    print("KERNEL_OK")
</pallas_src>

<mosaic_0001>
module attributes {stable_mosaic.version = 11 : i64} {
  func.func @_ngram_linear_kernel(%arg0: i32, %arg1: i32, %arg2: memref<16x48xbf16, #tpu.memory_space<vmem>>, %arg3: memref<48x128xbf16, #tpu.memory_space<vmem>>, %arg4: memref<1x128xf32, #tpu.memory_space<vmem>>, %arg5: memref<16x128xbf16, #tpu.memory_space<vmem>>) attributes {dimension_semantics = [#tpu.dimension_semantics<parallel>, #tpu.dimension_semantics<parallel>], iteration_bounds = array<i64: 1, 1>, scalar_prefetch = 0 : i64, scratch_operands = 0 : i64, tpu.core_type = #tpu.core_type<tc>, window_params = [{transform_indices = @transform_0, window_bounds = array<i64: 16, 48>}, {transform_indices = @transform_1, window_bounds = array<i64: 48, 128>}, {transform_indices = @transform_2, window_bounds = array<i64: 1, 128>}, {transform_indices = @transform_3, window_bounds = array<i64: 16, 128>}]} {
    %c0 = arith.constant 0 : index
    %c0_0 = arith.constant 0 : index
    %0 = vector.load %arg2[%c0, %c0_0] : memref<16x48xbf16, #tpu.memory_space<vmem>>, vector<16x48xbf16>
    %c0_1 = arith.constant 0 : index
    %c0_2 = arith.constant 0 : index
    %1 = vector.load %arg3[%c0_1, %c0_2] : memref<48x128xbf16, #tpu.memory_space<vmem>>, vector<48x128xbf16>
    %cst = arith.constant dense<0.000000e+00> : vector<16x128xf32>
    %2 = tpu.matmul %0, %1, %cst {dimension_numbers = #tpu.dot_dimension_numbers<[1], [0], [0], [1], [0, 0, 1, 1], [], []>} : vector<16x48xbf16>, vector<48x128xbf16>, vector<16x128xf32> -> vector<16x128xf32>
    %c0_3 = arith.constant 0 : index
    %c0_4 = arith.constant 0 : index
    %3 = vector.load %arg4[%c0_3, %c0_4] : memref<1x128xf32, #tpu.memory_space<vmem>>, vector<1x128xf32>
    %4 = vector.broadcast %3 : vector<1x128xf32> to vector<16x128xf32>
    %5 = arith.addf %2, %4 : vector<16x128xf32>
    %6 = arith.truncf %5 : vector<16x128xf32> to vector<16x128xbf16>
    %c0_5 = arith.constant 0 : index
    %c0_6 = arith.constant 0 : index
    %7 = vector.load %arg5[%c0_5, %c0_6] : memref<16x128xbf16, #tpu.memory_space<vmem>>, vector<16x128xbf16>
    tpu.vector_store %arg5[%c0_5, %c0_6], %6 {strides = array<i32>} : memref<16x128xbf16, #tpu.memory_space<vmem>>, vector<16x128xbf16>,
    return
  }
  func.func @transform_0(%arg0: i32, %arg1: i32) -> (i32, i32) {
    %c0_i32 = arith.constant 0 : i32
    %c0_i32_0 = arith.constant 0 : i32
    return %arg0, %c0_i32 : i32, i32
  }
  func.func @transform_1(%arg0: i32, %arg1: i32) -> (i32, i32) {
    %c0_i32 = arith.constant 0 : i32
    %c0_i32_0 = arith.constant 0 : i32
    return %c0_i32, %arg1 : i32, i32
  }
  func.func @transform_2(%arg0: i32, %arg1: i32) -> (i32, i32) {
    %c0_i32 = arith.constant 0 : i32
    %c0_i32_0 = arith.constant 0 : i32
    return %c0_i32, %arg1 : i32, i32
  }
  func.func @transform_3(%arg0: i32, %arg1: i32) -> (i32, i32) {
    %c0_i32 = arith.constant 0 : i32
    return %arg0, %arg1 : i32, i32
  }
}

</mosaic_0001>

<llo_original>
// kernel: forward.1
$region0: #{forward.1}
  #allocation0 [shape = 'u32[]', space=smem, size = 0x4, offset = 0x4, fixed_abs, tag = 'smem constant byte address 0x4 - core index']
  #allocation1 [shape = 'u32[144,128]{1,0:T(1,128)}', space=vmem, size = 0x12000, scoped, tag = 'internal scratch']
  %s0 = inlined_call_operand.vmem [shape: bf16[16,48], index: 0, kind: input, shape index: {}]
  %s1 = inlined_call_operand.vmem [shape: bf16[48,128], index: 1, kind: input, shape index: {}]
  %s2 = inlined_call_operand.vmem [shape: f32[1,128], index: 2, kind: input, shape index: {}]
  %s3 = inlined_call_operand.hbm [shape: bf16[16,128], index: 3, kind: output, shape index: {}]
  %s4 = sld [smem:[#allocation0]]
  $region22: #{forward.1} parent=0
    _
  %s6 = ssub.s32 1, %s4
  %s7 = scalar_select 0, %s6, %s4
  $region1: #{forward.1} parent=0
    #allocation2 [shape = 'u8[4096]{0}', space=vmem, size = 0x1000, scoped, tag = 'output window, operand 0, single buffered']
    #allocation3 [shape = 's32[1]{0}', space=sflag, size = 0x4, scoped, tag = 'scoped memory for forward.1']
    %8 = vsyncpa [#allocation3], 0
    // Predicated region
    $region2: #{forward.1} parent=1 // pred_check
      _
    $region3: #{forward.1} parent=1 // pred_check_branch
      %10 = sbr.rel (0) target = $region5
    $region4: #{forward.1} parent=1 // pred_region
      _
    $region5: #{forward.1} parent=1 // pred_fallthru
      _
    // Predicated region
    $region6: #{forward.1} parent=1 // pred_check
      _
    $region7: #{forward.1} parent=1 // pred_check_branch
      %12 = sbr.rel (0) target = $region9
    $region8: #{forward.1} parent=1 // pred_region
      _
    $region9: #{forward.1} parent=1 // pred_fallthru
      _
    // Predicated region
    $region10: #{forward.1} parent=1 // pred_check
      _
    $region11: #{forward.1} parent=1 // pred_check_branch
      %14 = sbr.rel (0) target = $region13
    $region12: #{forward.1} parent=1 // pred_region
      _
    $region13: #{forward.1} parent=1 // pred_fallthru
      _
    %v16 = vld [vmem:[%s0] sm:$0xf]
    %v17 = vld [vmem:[%s0 + $0x4] sm:$0xf]
    %v18 = vld [vmem:[%s1] sm:$0xf]
    %v19 = vld [vmem:[%s1 + $0x4] sm:$0xf]
    %v20 = vld [vmem:[%s1 + $0x8] sm:$0xf]
    %v21 = vld [vmem:[%s1 + $0xc] sm:$0xf]
    %v22 = vld [vmem:[%s1 + $0x10] sm:$0xf]
    %v23 = vld [vmem:[%s1 + $0x14] sm:$0xf]
    %v24 = vld [vmem:[%s2] sm:$0x1]
    %v26 = vlaneseq
    %v27 = vshrl.u32 %v26, 7
    %v28 = vsub.s32 0, %v27
    %v29 = vrot.slane %v24, %v28
    %v33 = vunpack.c.l.b16 %v16
    %v34 = vunpack.c.l.b16 %v17
    %v35 = vpack.c.b16 %v34, %v33
    %v42 = vunpack.c.l.b16 %v18
    %v43 = vunpack.c.l.b16 %v19
    %v44 = vunpack.c.l.b16 %v20
    %v45 = vunpack.c.l.b16 %v21
    %v46 = vunpack.c.l.b16 %v22
    %v47 = vunpack.c.l.b16 %v23
    %v48 = vpack.c.b16 %v43, %v42
    %v49 = vpack.c.b16 %v45, %v44
    %v50 = vpack.c.b16 %v47, %v46
    %vm54 = vcmask 392192
    %v56 = vsel %vm54, %v35, 0
    %58 = vmatprep.subr.bf16.mxu0 0
    %59 = vmatpush1.bf16.msra.mxu0 %v48
    %60 = vmatprep.subr.bf16.mxu0 0
    %61 = vmatpush1.bf16.msra.mxu0 %v49
    %62 = vmatprep.subr.bf16.mxu0 0
    %63 = vmatpush1.bf16.msra.mxu0 %v50
    %64 = vmatprep.subr.bf16.mxu0 0
    %65 = vmatpush1.bf16.msra.mxu0 0
    %66 = vmatprep.subr.bf16.mxu0 0
    %67 = vmatpush1.bf16.msra.mxu0 0
    %68 = vmatprep.subr.bf16.mxu0 0
    %69 = vmatpush1.bf16.msra.mxu0 0
    %70 = vmatprep.subr.bf16.mxu0 0
    %71 = vmatpush1.bf16.msra.mxu0 0
    %72 = vmatprep.subr.bf16.mxu0 0
    %73 = vmatpush1.bf16.msra.mxu0 0
    %74 = vmatprep.subr.bf16.mxu0 0
    %75 = vmatpush1.bf16.msra.mxu0 0
    %76 = vmatprep.subr.bf16.mxu0 0
    %77 = vmatpush1.bf16.msra.mxu0 0
    %78 = vmatprep.subr.bf16.mxu0 0
    %79 = vmatpush1.bf16.msra.mxu0 0
    %80 = vmatprep.subr.bf16.mxu0 0
    %81 = vmatpush1.bf16.msra.mxu0 0
    %82 = vmatprep.subr.bf16.mxu0 0
    %83 = vmatpush1.bf16.msra.mxu0 0
    %84 = vmatprep.subr.bf16.mxu0 0
    %85 = vmatpush1.bf16.msra.mxu0 0
    %86 = vmatprep.subr.bf16.mxu0 0
    %87 = vmatpush1.bf16.msra.mxu0 0
    %88 = vmatprep.subr.bf16.mxu0 0
    %89 = vmatpush1.bf16.msra.mxu0 0
    %90 = vmatprep.mubr.bf16.mxu0 0
    %91 = vmatmul.mubr.bf16.gmra.mrb[0].mxu0 %v56
    %v92 = vpop.f32.mrb[0].mxu0
    %v93 = vadd.f32 %v29, %v92
    %v94 = vpop.f32.mrb[0].mxu0
    %v95 = vpop.f32.mrb[0].mxu0
    %v96 = vadd.f32 %v29, %v95
    %v97 = vpop.f32.mrb[0].mxu0
    %98 = vdwg.mxu0
    %v99 = vpack.c.bf16 %v96, %v93
    %v101 = vunpack.c.l.b16 %v99
    %v102 = vunpack.c.h.b16 %v99
    %v103 = vpack.c.b16 %v101, %v101
    %v104 = vpack.c.b16 %v102, %v102
    %107 = vst [vmem:[#allocation2] sm:$0xf] %v103
    %108 = vst [vmem:[#allocation2 + $0x4] sm:$0xf] %v104
    // Predicated region
    $region14: #{forward.1} parent=1 // pred_check
      _
    $region15: #{forward.1} parent=1 // pred_check_branch
      %110 = sbr.rel (0) target = $region17
    $region16: #{forward.1} parent=1 // pred_region
      %s112 = ssub.s32 128, 128
      %113 = vsyncadd [#allocation3], %s112
      %s114 = sshll.u32 [#allocation2], 4
      %s115 = int_to_ptr.vmem [resolvable:$true] %s114
      %120 = dma.vmem_to_hbm [thread:$0]  %s115, 128, %s3, [#allocation3], 64, 64, 4
    $region17: #{forward.1} parent=1 // pred_fallthru
      _
    // Predicated region
    $region18: #{forward.1} parent=1 // pred_check
      _
    $region19: #{forward.1} parent=1 // pred_check_branch
      %122 = sbr.rel (0) target = $region21
    $region20: #{forward.1} parent=1 // pred_region
      %123 = dma.done [#allocation3], 128
    $region21: #{forward.1} parent=1 // pred_fallthru
      _
    %124 = vsyncpa [#allocation3], 1

</llo_original>
